<compile_context>
chip_gen: v7x
topology: tpu7x:2x2x1
jax: 0.10.0
libtpu: 0.0.40
codegen_flags: <defaults>
</compile_context>

<pallas_src>
import functools

import jax
import jax.numpy as jnp
from jax.experimental import pallas as pl
from jax.experimental.pallas import tpu as pltpu

LANE = 128
SUBLANE = 16  # valid sublane multiple for both f32 (8) and bf16 (16) tiles


def _round_up(n, m):
    return ((n + m - 1) // m) * m


def _pad2(a, rows, cols):
    return jnp.pad(a, ((0, rows - a.shape[0]), (0, cols - a.shape[1])))


def mlp_kernel(x_ref, w1_ref, b1_ref, g_ref, be_ref,
               w2_ref, b2_ref, w3_ref, b3_ref, o_ref, *, h0_real, eps):
    # Hoist small row vectors once (avoid re-materialized broadcasts).
    b1 = b1_ref[...]
    g = g_ref[...]
    be = be_ref[...]
    b2 = b2_ref[...]
    b3 = b3_ref[...]

    x = x_ref[...]

    # in_layer: Linear(input -> hidden0), no activation (matches forward()).
    h = jnp.dot(x, w1_ref[...], preferred_element_type=jnp.float32) + b1

    # LayerNorm over the REAL hidden0 features only (padded lanes of h are 0).
    h0_pad = h.shape[-1]
    lane_idx = jax.lax.broadcasted_iota(jnp.int32, (1, h0_pad), 1)
    mask = (lane_idx < h0_real).astype(jnp.float32)
    inv_n = 1.0 / float(h0_real)

    mu = jnp.sum(h, axis=-1, keepdims=True) * inv_n
    diff = h - mu
    var = jnp.sum(diff * diff * mask, axis=-1, keepdims=True) * inv_n
    hn = diff * jax.lax.rsqrt(var + eps)
    hn = hn * g + be  # padded gamma/beta lanes are 0 -> padded lanes zeroed

    # block: Linear(hidden0 -> hidden1) -> ReLU
    h2 = jnp.dot(hn.astype(w2_ref.dtype), w2_ref[...],
                 preferred_element_type=jnp.float32) + b2
    h2 = jnp.maximum(h2, 0.0)

    # out: Linear(hidden1 -> output)
    o_ref[...] = (jnp.dot(h2.astype(w3_ref.dtype), w3_ref[...],
                          preferred_element_type=jnp.float32) + b3
                  ).astype(o_ref.dtype)


def mlp_forward(x, params, *, compute_dtype=jnp.bfloat16, tile_batch=512):
    """x: [B, input_dim] f32. params: unpadded ([in,out] weights, [1,dim] rows)."""
    (w1, b1, g, be, w2, b2, w3, b3) = params
    B, in_dim = x.shape
    h0, h1, out_dim = w1.shape[1], w2.shape[1], w3.shape[1]

    in_p = _round_up(in_dim, LANE)
    h0_p = _round_up(h0, LANE)
    h1_p = _round_up(h1, LANE)
    out_p = _round_up(out_dim, LANE)

    tb = min(tile_batch, _round_up(B, SUBLANE))
    b_p = _round_up(B, tb)

    # Zero-pad everything to lane-dense shapes; matmul operands in compute_dtype,
    # LN / bias parameters kept in f32.
    xp = _pad2(x, b_p, in_p).astype(compute_dtype)
    w1p = _pad2(w1, in_p, h0_p).astype(compute_dtype)
    w2p = _pad2(w2, h0_p, h1_p).astype(compute_dtype)
    w3p = _pad2(w3, h1_p, out_p).astype(compute_dtype)
    b1p = _pad2(b1, 1, h0_p).astype(jnp.float32)
    gp = _pad2(g, 1, h0_p).astype(jnp.float32)    # padded gamma lanes = 0
    bep = _pad2(be, 1, h0_p).astype(jnp.float32)  # padded beta lanes = 0
    b2p = _pad2(b2, 1, h1_p).astype(jnp.float32)
    b3p = _pad2(b3, 1, out_p).astype(jnp.float32)

    grid = (b_p // tb,)

    def resident(shape):
        # Weights / params: same block every step -> stays VMEM-resident.
        return pl.BlockSpec(shape, lambda i: (0, 0))

    kernel = functools.partial(mlp_kernel, h0_real=h0, eps=1e-5)

    out = pl.pallas_call(
        kernel,
        out_shape=jax.ShapeDtypeStruct((b_p, out_p), jnp.float32),
        grid=grid,
        in_specs=[
            pl.BlockSpec((tb, in_p), lambda i: (i, 0)),   # streamed x tile
            resident((in_p, h0_p)),
            resident((1, h0_p)),
            resident((1, h0_p)),
            resident((1, h0_p)),
            resident((h0_p, h1_p)),
            resident((1, h1_p)),
            resident((h1_p, out_p)),
            resident((1, out_p)),
        ],
        out_specs=pl.BlockSpec((tb, out_p), lambda i: (i, 0)),  # lane-dense store
        compiler_params=pltpu.CompilerParams(
            dimension_semantics=("parallel",),        # shard batch tiles across TCs
            vmem_limit_bytes=32 * 1024 * 1024,        # tiles + resident weights << 32 MiB
        ),
    )(xp, w1p, b1p, gp, bep, w2p, b2p, w3p, b3p)

    return out[:B, :out_dim]


def init_params(key, input_dim, output_dim, hidden_dims=(64, 64)):
    """Deterministic PyTorch-style init; Linear weights returned as [in, out]."""
    ks = jax.random.split(key, 6)

    def linear(kw, kb, fan_in, fan_out):
        bound = 1.0 / jnp.sqrt(jnp.float32(fan_in))
        w = jax.random.uniform(kw, (fan_in, fan_out), jnp.float32, -bound, bound)
        b = jax.random.uniform(kb, (1, fan_out), jnp.float32, -bound, bound)
        return w, b

    w1, b1 = linear(ks[0], ks[1], input_dim, hidden_dims[0])
    gamma = jnp.ones((1, hidden_dims[0]), jnp.float32)
    beta = jnp.zeros((1, hidden_dims[0]), jnp.float32)
    w2, b2 = linear(ks[2], ks[3], hidden_dims[0], hidden_dims[1])
    w3, b3 = linear(ks[4], ks[5], hidden_dims[1], output_dim)
    return (w1, b1, gamma, beta, w2, b2, w3, b3)


def mlp_ref(x, params):
    (w1, b1, g, be, w2, b2, w3, b3) = params
    h = x @ w1 + b1
    mu = h.mean(-1, keepdims=True)
    var = ((h - mu) ** 2).mean(-1, keepdims=True)
    hn = (h - mu) / jnp.sqrt(var + 1e-5) * g + be
    h2 = jnp.maximum(hn @ w2 + b2, 0.0)
    return h2 @ w3 + b3


if __name__ == "__main__":
    key = jax.random.PRNGKey(0)
    k_x, k_p = jax.random.split(key)

    batch, input_dim, output_dim = 8, 32, 8
    hidden_dims = (64, 64)

    x = jax.random.normal(k_x, (batch, input_dim), jnp.float32)
    params = init_params(k_p, input_dim, output_dim, hidden_dims)

    ref = mlp_ref(x, params)

    # 1) Exact-semantics check: f32 operands (same math as the PyTorch module).
    out_f32 = jax.block_until_ready(
        mlp_forward(x, params, compute_dtype=jnp.float32))
    assert out_f32.shape == (batch, output_dim)
    assert jnp.allclose(out_f32, ref, atol=1e-4, rtol=1e-4)

    # 2) Performance configuration: bf16 matmul operands, f32 accumulate.
    out_bf16 = jax.block_until_ready(mlp_forward(x, params))
    assert out_bf16.shape == (batch, output_dim)
    assert jnp.allclose(out_bf16, ref, atol=5e-2, rtol=5e-2)

    print("KERNEL_OK")
</pallas_src>

<mosaic_0001>
module attributes {stable_mosaic.version = 11 : i64} {
  func.func @mlp_kernel(%arg0: i32, %arg1: memref<16x128xf32, #tpu.memory_space<vmem>>, %arg2: memref<128x128xf32, #tpu.memory_space<vmem>>, %arg3: memref<1x128xf32, #tpu.memory_space<vmem>>, %arg4: memref<1x128xf32, #tpu.memory_space<vmem>>, %arg5: memref<1x128xf32, #tpu.memory_space<vmem>>, %arg6: memref<128x128xf32, #tpu.memory_space<vmem>>, %arg7: memref<1x128xf32, #tpu.memory_space<vmem>>, %arg8: memref<128x128xf32, #tpu.memory_space<vmem>>, %arg9: memref<1x128xf32, #tpu.memory_space<vmem>>, %arg10: memref<16x128xf32, #tpu.memory_space<vmem>>) attributes {dimension_semantics = [#tpu.dimension_semantics<parallel>], iteration_bounds = array<i64: 1>, scalar_prefetch = 0 : i64, scratch_operands = 0 : i64, tpu.core_type = #tpu.core_type<tc>, window_params = [{transform_indices = @transform_0, window_bounds = array<i64: 16, 128>}, {pipeline_mode = #tpu.pipeline_mode<synchronous>, transform_indices = @transform_1, window_bounds = array<i64: 128, 128>}, {pipeline_mode = #tpu.pipeline_mode<synchronous>, transform_indices = @transform_2, window_bounds = array<i64: 1, 128>}, {pipeline_mode = #tpu.pipeline_mode<synchronous>, transform_indices = @transform_3, window_bounds = array<i64: 1, 128>}, {pipeline_mode = #tpu.pipeline_mode<synchronous>, transform_indices = @transform_4, window_bounds = array<i64: 1, 128>}, {pipeline_mode = #tpu.pipeline_mode<synchronous>, transform_indices = @transform_5, window_bounds = array<i64: 128, 128>}, {pipeline_mode = #tpu.pipeline_mode<synchronous>, transform_indices = @transform_6, window_bounds = array<i64: 1, 128>}, {pipeline_mode = #tpu.pipeline_mode<synchronous>, transform_indices = @transform_7, window_bounds = array<i64: 128, 128>}, {pipeline_mode = #tpu.pipeline_mode<synchronous>, transform_indices = @transform_8, window_bounds = array<i64: 1, 128>}, {transform_indices = @transform_9, window_bounds = array<i64: 16, 128>}]} {
    %c0 = arith.constant 0 : index
    %c0_0 = arith.constant 0 : index
    %0 = vector.load %arg3[%c0, %c0_0] : memref<1x128xf32, #tpu.memory_space<vmem>>, vector<1x128xf32>
    %c0_1 = arith.constant 0 : index
    %c0_2 = arith.constant 0 : index
    %1 = vector.load %arg4[%c0_1, %c0_2] : memref<1x128xf32, #tpu.memory_space<vmem>>, vector<1x128xf32>
    %c0_3 = arith.constant 0 : index
    %c0_4 = arith.constant 0 : index
    %2 = vector.load %arg5[%c0_3, %c0_4] : memref<1x128xf32, #tpu.memory_space<vmem>>, vector<1x128xf32>
    %c0_5 = arith.constant 0 : index
    %c0_6 = arith.constant 0 : index
    %3 = vector.load %arg7[%c0_5, %c0_6] : memref<1x128xf32, #tpu.memory_space<vmem>>, vector<1x128xf32>
    %c0_7 = arith.constant 0 : index
    %c0_8 = arith.constant 0 : index
    %4 = vector.load %arg9[%c0_7, %c0_8] : memref<1x128xf32, #tpu.memory_space<vmem>>, vector<1x128xf32>
    %c0_9 = arith.constant 0 : index
    %c0_10 = arith.constant 0 : index
    %5 = vector.load %arg1[%c0_9, %c0_10] : memref<16x128xf32, #tpu.memory_space<vmem>>, vector<16x128xf32>
    %c0_11 = arith.constant 0 : index
    %c0_12 = arith.constant 0 : index
    %6 = vector.load %arg2[%c0_11, %c0_12] : memref<128x128xf32, #tpu.memory_space<vmem>>, vector<128x128xf32>
    %cst = arith.constant dense<0.000000e+00> : vector<16x128xf32>
    %7 = tpu.matmul %5, %6, %cst {dimension_numbers = #tpu.dot_dimension_numbers<[1], [0], [0], [1], [0, 0, 1, 1], [], []>} : vector<16x128xf32>, vector<128x128xf32>, vector<16x128xf32> -> vector<16x128xf32>
    %8 = vector.broadcast %0 : vector<1x128xf32> to vector<16x128xf32>
    %9 = arith.addf %7, %8 : vector<16x128xf32>
    %10 = tpu.iota {dimensions = array<i32: 1>} : vector<1x128xi32>
    %c64_i32 = arith.constant 64 : i32
    %11 = vector.broadcast %c64_i32 : i32 to vector<1x128xi32>
    %12 = arith.cmpi slt, %10, %11 : vector<1x128xi32>
    %13 = arith.extui %12 : vector<1x128xi1> to vector<1x128xi32>
    %14 = arith.sitofp %13 : vector<1x128xi32> to vector<1x128xf32>
    %cst_13 = arith.constant dense<0.000000e+00> : vector<16xf32>
    %15 = vector.multi_reduction <add>, %9, %cst_13 [1] : vector<16x128xf32> to vector<16xf32>
    %16 = vector.shape_cast %15 : vector<16xf32> to vector<16x1xf32>
    %cst_14 = arith.constant 1.562500e-02 : f32
    %17 = vector.broadcast %cst_14 : f32 to vector<16x1xf32>
    %18 = arith.mulf %16, %17 : vector<16x1xf32>
    %19 = vector.broadcast %18 : vector<16x1xf32> to vector<16x128xf32>
    %20 = arith.subf %9, %19 : vector<16x128xf32>
    %21 = arith.mulf %20, %20 : vector<16x128xf32>
    %22 = vector.broadcast %14 : vector<1x128xf32> to vector<16x128xf32>
    %23 = arith.mulf %21, %22 : vector<16x128xf32>
    %cst_15 = arith.constant dense<0.000000e+00> : vector<16xf32>
    %24 = vector.multi_reduction <add>, %23, %cst_15 [1] : vector<16x128xf32> to vector<16xf32>
    %25 = vector.shape_cast %24 : vector<16xf32> to vector<16x1xf32>
    %cst_16 = arith.constant 1.562500e-02 : f32
    %26 = vector.broadcast %cst_16 : f32 to vector<16x1xf32>
    %27 = arith.mulf %25, %26 : vector<16x1xf32>
    %cst_17 = arith.constant 9.99999974E-6 : f32
    %28 = vector.broadcast %cst_17 : f32 to vector<16x1xf32>
    %29 = arith.addf %27, %28 : vector<16x1xf32>
    %30 = math.rsqrt %29 : vector<16x1xf32>
    %31 = vector.broadcast %30 : vector<16x1xf32> to vector<16x128xf32>
    %32 = arith.mulf %20, %31 : vector<16x128xf32>
    %33 = vector.broadcast %1 : vector<1x128xf32> to vector<16x128xf32>
    %34 = arith.mulf %32, %33 : vector<16x128xf32>
    %35 = vector.broadcast %2 : vector<1x128xf32> to vector<16x128xf32>
    %36 = arith.addf %34, %35 : vector<16x128xf32>
    %c0_18 = arith.constant 0 : index
    %c0_19 = arith.constant 0 : index
    %37 = vector.load %arg6[%c0_18, %c0_19] : memref<128x128xf32, #tpu.memory_space<vmem>>, vector<128x128xf32>
    %cst_20 = arith.constant dense<0.000000e+00> : vector<16x128xf32>
    %38 = tpu.matmul %36, %37, %cst_20 {dimension_numbers = #tpu.dot_dimension_numbers<[1], [0], [0], [1], [0, 0, 1, 1], [], []>} : vector<16x128xf32>, vector<128x128xf32>, vector<16x128xf32> -> vector<16x128xf32>
    %39 = vector.broadcast %3 : vector<1x128xf32> to vector<16x128xf32>
    %40 = arith.addf %38, %39 : vector<16x128xf32>
    %cst_21 = arith.constant 0.000000e+00 : f32
    %41 = vector.broadcast %cst_21 : f32 to vector<16x128xf32>
    %42 = arith.maximumf %40, %41 : vector<16x128xf32>
    %c0_22 = arith.constant 0 : index
    %c0_23 = arith.constant 0 : index
    %43 = vector.load %arg8[%c0_22, %c0_23] : memref<128x128xf32, #tpu.memory_space<vmem>>, vector<128x128xf32>
    %cst_24 = arith.constant dense<0.000000e+00> : vector<16x128xf32>
    %44 = tpu.matmul %42, %43, %cst_24 {dimension_numbers = #tpu.dot_dimension_numbers<[1], [0], [0], [1], [0, 0, 1, 1], [], []>} : vector<16x128xf32>, vector<128x128xf32>, vector<16x128xf32> -> vector<16x128xf32>
    %45 = vector.broadcast %4 : vector<1x128xf32> to vector<16x128xf32>
    %46 = arith.addf %44, %45 : vector<16x128xf32>
    %c0_25 = arith.constant 0 : index
    %c0_26 = arith.constant 0 : index
    %47 = vector.load %arg10[%c0_25, %c0_26] : memref<16x128xf32, #tpu.memory_space<vmem>>, vector<16x128xf32>
    tpu.vector_store %arg10[%c0_25, %c0_26], %46 {strides = array<i32>} : memref<16x128xf32, #tpu.memory_space<vmem>>, vector<16x128xf32>,
    return
  }
  func.func @transform_0(%arg0: i32) -> (i32, i32) {
    %c0_i32 = arith.constant 0 : i32
    %c0_i32_0 = arith.constant 0 : i32
    return %arg0, %c0_i32 : i32, i32
  }
  func.func @transform_1(%arg0: i32) -> (i32, i32) {
    %c0_i32 = arith.constant 0 : i32
    %c0_i32_0 = arith.constant 0 : i32
    %c0_i32_1 = arith.constant 0 : i32
    return %c0_i32, %c0_i32_0 : i32, i32
  }
  func.func @transform_2(%arg0: i32) -> (i32, i32) {
    %c0_i32 = arith.constant 0 : i32
    %c0_i32_0 = arith.constant 0 : i32
    %c0_i32_1 = arith.constant 0 : i32
    return %c0_i32, %c0_i32_0 : i32, i32
  }
  func.func @transform_3(%arg0: i32) -> (i32, i32) {
    %c0_i32 = arith.constant 0 : i32
    %c0_i32_0 = arith.constant 0 : i32
    %c0_i32_1 = arith.constant 0 : i32
    return %c0_i32, %c0_i32_0 : i32, i32
  }
  func.func @transform_4(%arg0: i32) -> (i32, i32) {
    %c0_i32 = arith.constant 0 : i32
    %c0_i32_0 = arith.constant 0 : i32
    %c0_i32_1 = arith.constant 0 : i32
    return %c0_i32, %c0_i32_0 : i32, i32
  }
  func.func @transform_5(%arg0: i32) -> (i32, i32) {
    %c0_i32 = arith.constant 0 : i32
    %c0_i32_0 = arith.constant 0 : i32
    %c0_i32_1 = arith.constant 0 : i32
    return %c0_i32, %c0_i32_0 : i32, i32
  }
  func.func @transform_6(%arg0: i32) -> (i32, i32) {
    %c0_i32 = arith.constant 0 : i32
    %c0_i32_0 = arith.constant 0 : i32
    %c0_i32_1 = arith.constant 0 : i32
    return %c0_i32, %c0_i32_0 : i32, i32
  }
  func.func @transform_7(%arg0: i32) -> (i32, i32) {
    %c0_i32 = arith.constant 0 : i32
    %c0_i32_0 = arith.constant 0 : i32
    %c0_i32_1 = arith.constant 0 : i32
    return %c0_i32, %c0_i32_0 : i32, i32
  }
  func.func @transform_8(%arg0: i32) -> (i32, i32) {
    %c0_i32 = arith.constant 0 : i32
    %c0_i32_0 = arith.constant 0 : i32
    %c0_i32_1 = arith.constant 0 : i32
    return %c0_i32, %c0_i32_0 : i32, i32
  }
  func.func @transform_9(%arg0: i32) -> (i32, i32) {
    %c0_i32 = arith.constant 0 : i32
    %c0_i32_0 = arith.constant 0 : i32
    return %arg0, %c0_i32 : i32, i32
  }
}

</mosaic_0001>

<llo_original>
// kernel: tpu_custom_call.1
$region0: #{tpu_custom_call.1}
  #allocation0 [shape = 'u32[]', space=smem, size = 0x4, offset = 0x4, fixed_abs, tag = 'smem constant byte address 0x4 - core index']
  #allocation1 [shape = 'u32[144,128]{1,0:T(1,128)}', space=vmem, size = 0x12000, scoped, tag = 'internal scratch']
  %s0 = inlined_call_operand.hbm [shape: f32[16,128], index: 0, kind: input, shape index: {}]
  %s1 = inlined_call_operand.hbm [shape: f32[128,128], index: 1, kind: input, shape index: {}]
  %s2 = inlined_call_operand.vmem [shape: f32[1,128], index: 2, kind: input, shape index: {}]
  %s3 = inlined_call_operand.vmem [shape: f32[1,128], index: 3, kind: input, shape index: {}]
  %s4 = inlined_call_operand.vmem [shape: f32[1,128], index: 4, kind: input, shape index: {}]
  %s5 = inlined_call_operand.hbm [shape: f32[128,128], index: 5, kind: input, shape index: {}]
  %s6 = inlined_call_operand.vmem [shape: f32[1,128], index: 6, kind: input, shape index: {}]
  %s7 = inlined_call_operand.hbm [shape: f32[128,128], index: 7, kind: input, shape index: {}]
  %s8 = inlined_call_operand.vmem [shape: f32[1,128], index: 8, kind: input, shape index: {}]
  %s9 = inlined_call_operand.hbm [shape: f32[16,128], index: 9, kind: output, shape index: {}]
  %s10 = sld [smem:[#allocation0]]
  $region62: #{tpu_custom_call.1} parent=0
    _
  %s12 = ssub.s32 1, %s10
  %s13 = scalar_select 0, %s12, %s10
  $region1: #{tpu_custom_call.1} parent=0
    #allocation2 [shape = 'u8[8192]{0}', space=vmem, size = 0x2000, scoped, tag = 'input window, operand 0, single buffered']
    #allocation3 [shape = 's32[1]{0}', space=sflag, size = 0x4, scoped, tag = 'scoped memory for tpu_custom_call.1']
    #allocation4 [shape = 's32[1]{0}', space=sflag, size = 0x4, scoped, tag = 'scoped memory for tpu_custom_call.1']
    #allocation5 [shape = 'u8[65536]{0}', space=vmem, size = 0x10000, scoped, tag = 'input window, operand 1, single buffered']
    #allocation6 [shape = 's32[1]{0}', space=sflag, size = 0x4, scoped, tag = 'scoped memory for tpu_custom_call.1']
    #allocation7 [shape = 'u8[65536]{0}', space=vmem, size = 0x10000, scoped, tag = 'input window, operand 5, single buffered']
    #allocation8 [shape = 'u8[65536]{0}', space=vmem, size = 0x10000, scoped, tag = 'input window, operand 7, single buffered']
    #allocation9 [shape = 's32[1]{0}', space=sflag, size = 0x4, scoped, tag = 'scoped memory for tpu_custom_call.1']
    #allocation10 [shape = 'u8[8192]{0}', space=vmem, size = 0x2000, scoped, tag = 'output window, operand 0, single buffered']
    %14 = vsyncpa [#allocation3], 0
    %15 = vsyncpa [#allocation6], 0
    %16 = vsyncpa [#allocation9], 0
    %17 = vsyncpa [#allocation4], 0
    // Predicated region
    $region2: #{tpu_custom_call.1} parent=1 // pred_check
      _
    $region3: #{tpu_custom_call.1} parent=1 // pred_check_branch
      %19 = sbr.rel (0) target = $region5
    $region4: #{tpu_custom_call.1} parent=1 // pred_region
      %s21 = ssub.s32 256, 256
      %22 = vsyncadd [#allocation3], %s21
      %s23 = sshll.u32 [#allocation2], 4
      %s24 = int_to_ptr.vmem [resolvable:$true] %s23
      %29 = dma.hbm_to_vmem [thread:$0]  %s0, 256, %s24, [#allocation3], 128, 128, 8
    $region5: #{tpu_custom_call.1} parent=1 // pred_fallthru
      _
    // Predicated region
    $region6: #{tpu_custom_call.1} parent=1 // pred_check
      _
    $region7: #{tpu_custom_call.1} parent=1 // pred_check_branch
      %31 = sbr.rel (0) target = $region9
    $region8: #{tpu_custom_call.1} parent=1 // pred_region
      %s33 = ssub.s32 2048, 2048
      %34 = vsyncadd [#allocation6], %s33
      %s35 = sshll.u32 [#allocation5], 4
      %s36 = int_to_ptr.vmem [resolvable:$true] %s35
      %41 = dma.hbm_to_vmem [thread:$0]  %s1, 2048, %s36, [#allocation6], 128, 128, 8
    $region9: #{tpu_custom_call.1} parent=1 // pred_fallthru
      _
    // Predicated region
    $region10: #{tpu_custom_call.1} parent=1 // pred_check
      _
    $region11: #{tpu_custom_call.1} parent=1 // pred_check_branch
      %43 = sbr.rel (0) target = $region13
    $region12: #{tpu_custom_call.1} parent=1 // pred_region
      _
    $region13: #{tpu_custom_call.1} parent=1 // pred_fallthru
      _
    // Predicated region
    $region14: #{tpu_custom_call.1} parent=1 // pred_check
      _
    $region15: #{tpu_custom_call.1} parent=1 // pred_check_branch
      %45 = sbr.rel (0) target = $region17
    $region16: #{tpu_custom_call.1} parent=1 // pred_region
      _
    $region17: #{tpu_custom_call.1} parent=1 // pred_fallthru
      _
    // Predicated region
    $region18: #{tpu_custom_call.1} parent=1 // pred_check
      _
    $region19: #{tpu_custom_call.1} parent=1 // pred_check_branch
      %47 = sbr.rel (0) target = $region21
    $region20: #{tpu_custom_call.1} parent=1 // pred_region
      _
    $region21: #{tpu_custom_call.1} parent=1 // pred_fallthru
      _
    // Predicated region
    $region22: #{tpu_custom_call.1} parent=1 // pred_check
      _
    $region23: #{tpu_custom_call.1} parent=1 // pred_check_branch
      %49 = sbr.rel (0) target = $region25
    $region24: #{tpu_custom_call.1} parent=1 // pred_region
      %s51 = ssub.s32 2048, 2048
      %52 = vsyncadd [#allocation6], %s51
      %s53 = sshll.u32 [#allocation7], 4
      %s54 = int_to_ptr.vmem [resolvable:$true] %s53
      %59 = dma.hbm_to_vmem [thread:$0]  %s5, 2048, %s54, [#allocation6], 128, 128, 8
    $region25: #{tpu_custom_call.1} parent=1 // pred_fallthru
      _
    // Predicated region
    $region26: #{tpu_custom_call.1} parent=1 // pred_check
      _
    $region27: #{tpu_custom_call.1} parent=1 // pred_check_branch
      %61 = sbr.rel (0) target = $region29
    $region28: #{tpu_custom_call.1} parent=1 // pred_region
      _
    $region29: #{tpu_custom_call.1} parent=1 // pred_fallthru
      _
    // Predicated region
    $region30: #{tpu_custom_call.1} parent=1 // pred_check
      _
    $region31: #{tpu_custom_call.1} parent=1 // pred_check_branch
      %63 = sbr.rel (0) target = $region33
    $region32: #{tpu_custom_call.1} parent=1 // pred_region
      %s65 = ssub.s32 2048, 2048
      %66 = vsyncadd [#allocation9], %s65
      %s67 = sshll.u32 [#allocation8], 4
      %s68 = int_to_ptr.vmem [resolvable:$true] %s67
      %73 = dma.hbm_to_vmem [thread:$0]  %s7, 2048, %s68, [#allocation9], 128, 128, 8
    $region33: #{tpu_custom_call.1} parent=1 // pred_fallthru
      _
    // Predicated region
    $region34: #{tpu_custom_call.1} parent=1 // pred_check
      _
    $region35: #{tpu_custom_call.1} parent=1 // pred_check_branch
      %75 = sbr.rel (0) target = $region37
    $region36: #{tpu_custom_call.1} parent=1 // pred_region
      _
    $region37: #{tpu_custom_call.1} parent=1 // pred_fallthru
      _
    // Predicated region
    $region38: #{tpu_custom_call.1} parent=1 // pred_check
      _
    $region39: #{tpu_custom_call.1} parent=1 // pred_check_branch
      %77 = sbr.rel (0) target = $region41
    $region40: #{tpu_custom_call.1} parent=1 // pred_region
      %78 = dma.done [#allocation3], 256
    $region41: #{tpu_custom_call.1} parent=1 // pred_fallthru
      _
    // Predicated region
    $region42: #{tpu_custom_call.1} parent=1 // pred_check
      _
    $region43: #{tpu_custom_call.1} parent=1 // pred_check_branch
      %80 = sbr.rel (0) target = $region45
    $region44: #{tpu_custom_call.1} parent=1 // pred_region
      %81 = dma.done [#allocation6], 2048
    $region45: #{tpu_custom_call.1} parent=1 // pred_fallthru
      _
    // Predicated region
    $region46: #{tpu_custom_call.1} parent=1 // pred_check
      _
    $region47: #{tpu_custom_call.1} parent=1 // pred_check_branch
      %83 = sbr.rel (0) target = $region49
    $region48: #{tpu_custom_call.1} parent=1 // pred_region
      %84 = dma.done [#allocation6], 2048
    $region49: #{tpu_custom_call.1} parent=1 // pred_fallthru
      _
    // Predicated region
    $region50: #{tpu_custom_call.1} parent=1 // pred_check
      _
    $region51: #{tpu_custom_call.1} parent=1 // pred_check_branch
      %86 = sbr.rel (0) target = $region53
    $region52: #{tpu_custom_call.1} parent=1 // pred_region
      %87 = dma.done [#allocation9], 2048
    $region53: #{tpu_custom_call.1} parent=1 // pred_fallthru
      _
    %v88 = vld [vmem:[%s2] sm:$0x1]
    %v89 = vld [vmem:[%s3] sm:$0x1]
    %v90 = vld [vmem:[%s4] sm:$0x1]
    %v91 = vld [vmem:[%s6] sm:$0x1]
    %v92 = vld [vmem:[%s8] sm:$0x1]
    %v93 = vld [vmem:[#allocation2] sm:$0xff]
    %v94 = vld [vmem:[#allocation2 + $0x8] sm:$0xff]
    %v95 = vld [vmem:[#allocation5] sm:$0xff]
    %v96 = vld [vmem:[#allocation5 + $0x8] sm:$0xff]
    %v97 = vld [vmem:[#allocation5 + $0x10] sm:$0xff]
    %v98 = vld [vmem:[#allocation5 + $0x18] sm:$0xff]
    %v99 = vld [vmem:[#allocation5 + $0x20] sm:$0xff]
    %v100 = vld [vmem:[#allocation5 + $0x28] sm:$0xff]
    %v101 = vld [vmem:[#allocation5 + $0x30] sm:$0xff]
    %v102 = vld [vmem:[#allocation5 + $0x38] sm:$0xff]
    %v103 = vld [vmem:[#allocation5 + $0x40] sm:$0xff]
    %v104 = vld [vmem:[#allocation5 + $0x48] sm:$0xff]
    %v105 = vld [vmem:[#allocation5 + $0x50] sm:$0xff]
    %v106 = vld [vmem:[#allocation5 + $0x58] sm:$0xff]
    %v107 = vld [vmem:[#allocation5 + $0x60] sm:$0xff]
    %v108 = vld [vmem:[#allocation5 + $0x68] sm:$0xff]
    %v109 = vld [vmem:[#allocation5 + $0x70] sm:$0xff]
    %v110 = vld [vmem:[#allocation5 + $0x78] sm:$0xff]
    %v112 = vlaneseq
    %v113 = vshrl.u32 %v112, 7
    %v114 = vsub.s32 0, %v113
    %v115 = vrot.slane %v88, %v114
    %117 = vmatprep.subr.mxu0 0.0
    %118 = vmatpush1.msra.mxu0 %v95
    %119 = vmatprep.subr.mxu0 0.0
    %120 = vmatpush1.msra.mxu0 %v96
    %121 = vmatprep.subr.mxu0 0.0
    %122 = vmatpush1.msra.mxu0 %v97
    %123 = vmatprep.subr.mxu0 0.0
    %124 = vmatpush1.msra.mxu0 %v98
    %125 = vmatprep.subr.mxu0 0.0
    %126 = vmatpush1.msra.mxu0 %v99
    %127 = vmatprep.subr.mxu0 0.0
    %128 = vmatpush1.msra.mxu0 %v100
    %129 = vmatprep.subr.mxu0 0.0
    %130 = vmatpush1.msra.mxu0 %v101
    %131 = vmatprep.subr.mxu0 0.0
    %132 = vmatpush1.msra.mxu0 %v102
    %133 = vmatprep.subr.mxu0 0.0
    %134 = vmatpush1.msra.mxu0 %v103
    %135 = vmatprep.subr.mxu0 0.0
    %136 = vmatpush1.msra.mxu0 %v104
    %137 = vmatprep.subr.mxu0 0.0
    %138 = vmatpush1.msra.mxu0 %v105
    %139 = vmatprep.subr.mxu0 0.0
    %140 = vmatpush1.msra.mxu0 %v106
    %141 = vmatprep.subr.mxu0 0.0
    %142 = vmatpush1.msra.mxu0 %v107
    %143 = vmatprep.subr.mxu0 0.0
    %144 = vmatpush1.msra.mxu0 %v108
    %145 = vmatprep.subr.mxu0 0.0
    %146 = vmatpush1.msra.mxu0 %v109
    %147 = vmatprep.subr.mxu0 0.0
    %148 = vmatpush1.msra.mxu0 %v110
    %149 = vmatprep.subr.mxu0 0.0
    %150 = vmatpush1.msra.mxu0 0.0
    %151 = vmatprep.subr.mxu0 0.0
    %152 = vmatpush1.msra.mxu0 0.0
    %153 = vmatprep.subr.mxu0 0.0
    %154 = vmatpush1.msra.mxu0 0.0
    %155 = vmatprep.subr.mxu0 0.0
    %156 = vmatpush1.msra.mxu0 0.0
    %157 = vmatprep.subr.mxu0 0.0
    %158 = vmatpush1.msra.mxu0 0.0
    %159 = vmatprep.subr.mxu0 0.0
    %160 = vmatpush1.msra.mxu0 0.0
    %161 = vmatprep.subr.mxu0 0.0
    %162 = vmatpush1.msra.mxu0 0.0
    %163 = vmatprep.subr.mxu0 0.0
    %164 = vmatpush1.msra.mxu0 0.0
    %165 = vmatprep.subr.mxu0 0.0
    %166 = vmatpush1.msra.mxu0 0.0
    %167 = vmatprep.subr.mxu0 0.0
    %168 = vmatpush1.msra.mxu0 0.0
    %169 = vmatprep.subr.mxu0 0.0
    %170 = vmatpush1.msra.mxu0 0.0
    %171 = vmatprep.subr.mxu0 0.0
    %172 = vmatpush1.msra.mxu0 0.0
    %173 = vmatprep.subr.mxu0 0.0
    %174 = vmatpush1.msra.mxu0 0.0
    %175 = vmatprep.subr.mxu0 0.0
    %176 = vmatpush1.msra.mxu0 0.0
    %177 = vmatprep.subr.mxu0 0.0
    %178 = vmatpush1.msra.mxu0 0.0
    %179 = vmatprep.subr.mxu0 0.0
    %180 = vmatpush1.msra.mxu0 0.0
    %181 = vmatprep.mubr.f32.mxu0 0.0
    %182 = vmatmul.mubr.f32.gmra.mrb[0].mxu0 %v93
    %v183 = vpop.f32.mrb[0].mxu0
    %v184 = vadd.f32 %v115, %v183
    %v185 = vpop.f32.mrb[0].mxu0
    %186 = vmatprep.mubr.f32.mxu0 0.0
    %187 = vmatmul.mubr.f32.gmra.mrb[0].mxu0 %v94
    %v188 = vpop.f32.mrb[0].mxu0
    %v189 = vadd.f32 %v115, %v188
    %v190 = vpop.f32.mrb[0].mxu0
    %191 = vdwg.mxu0
    %v192 = vlaneseq
    %v193 = vand.u32 %v192, 127
    %vm194 = vcmp.lt.s32.totalorder %v193, 64
    %v195 = vsel %vm194, 1, 0
    %v196 = vcvt.s32.f32 %v195
    %197 = vadd.xlane.f32.xlu0 %v184
    %v198 = vpop.xlane.xlu0 %197
    %199 = vadd.xlane.f32.xlu0 %v189
    %v200 = vpop.xlane.xlu0 %199
    %v201 = vmul.f32 %v198, 0.015625
    %v202 = vmul.f32 %v200, 0.015625
    %v203 = vsub.f32 %v184, %v201
    %v204 = vsub.f32 %v189, %v202
    %v205 = vmul.f32 %v203, %v203
    %v206 = vmul.f32 %v204, %v204
    %v207 = vmul.f32 %v205, %v196
    %v208 = vmul.f32 %v206, %v196
    %209 = vadd.xlane.f32.xlu0 %v207
    %v210 = vpop.xlane.xlu0 %209
    %211 = vadd.xlane.f32.xlu0 %v208
    %v212 = vpop.xlane.xlu0 %211
    %v213 = vmul.f32 %v210, 0.015625
    %v214 = vmul.f32 %v212, 0.015625
    %v215 = vadd.f32 %v213, 1e-05
    %v216 = vadd.f32 %v214, 1e-05
    %v217 = vrsqrt.pop %v215
    %v218 = vrsqrt.pop %v216
    %v219 = vmul.f32 %v203, %v217
    %v220 = vmul.f32 %v204, %v218
    %v222 = vlaneseq
    %v223 = vshrl.u32 %v222, 7
    %v224 = vsub.s32 0, %v223
    %v225 = vrot.slane %v89, %v224
    %v227 = vmul.f32 %v219, %v225
    %v228 = vmul.f32 %v220, %v225
    %v230 = vlaneseq
    %v231 = vshrl.u32 %v230, 7
    %v232 = vsub.s32 0, %v231
    %v233 = vrot.slane %v90, %v232
    %v235 = vadd.f32 %v227, %v233
    %v236 = vadd.f32 %v228, %v233
    %v237 = vld [vmem:[#allocation7] sm:$0xff]
    %v238 = vld [vmem:[#allocation7 + $0x8] sm:$0xff]
    %v239 = vld [vmem:[#allocation7 + $0x10] sm:$0xff]
    %v240 = vld [vmem:[#allocation7 + $0x18] sm:$0xff]
    %v241 = vld [vmem:[#allocation7 + $0x20] sm:$0xff]
    %v242 = vld [vmem:[#allocation7 + $0x28] sm:$0xff]
    %v243 = vld [vmem:[#allocation7 + $0x30] sm:$0xff]
    %v244 = vld [vmem:[#allocation7 + $0x38] sm:$0xff]
    %v245 = vld [vmem:[#allocation7 + $0x40] sm:$0xff]
    %v246 = vld [vmem:[#allocation7 + $0x48] sm:$0xff]
    %v247 = vld [vmem:[#allocation7 + $0x50] sm:$0xff]
    %v248 = vld [vmem:[#allocation7 + $0x58] sm:$0xff]
    %v249 = vld [vmem:[#allocation7 + $0x60] sm:$0xff]
    %v250 = vld [vmem:[#allocation7 + $0x68] sm:$0xff]
    %v251 = vld [vmem:[#allocation7 + $0x70] sm:$0xff]
    %v252 = vld [vmem:[#allocation7 + $0x78] sm:$0xff]
    %v254 = vlaneseq
    %v255 = vshrl.u32 %v254, 7
    %v256 = vsub.s32 0, %v255
    %v257 = vrot.slane %v91, %v256
    %259 = vmatprep.subr.mxu0 0.0
    %260 = vmatpush1.msra.mxu0 %v237
    %261 = vmatprep.subr.mxu0 0.0
    %262 = vmatpush1.msra.mxu0 %v238
    %263 = vmatprep.subr.mxu0 0.0
    %264 = vmatpush1.msra.mxu0 %v239
    %265 = vmatprep.subr.mxu0 0.0
    %266 = vmatpush1.msra.mxu0 %v240
    %267 = vmatprep.subr.mxu0 0.0
    %268 = vmatpush1.msra.mxu0 %v241
    %269 = vmatprep.subr.mxu0 0.0
    %270 = vmatpush1.msra.mxu0 %v242
    %271 = vmatprep.subr.mxu0 0.0
    %272 = vmatpush1.msra.mxu0 %v243
    %273 = vmatprep.subr.mxu0 0.0
    %274 = vmatpush1.msra.mxu0 %v244
    %275 = vmatprep.subr.mxu0 0.0
    %276 = vmatpush1.msra.mxu0 %v245
    %277 = vmatprep.subr.mxu0 0.0
    %278 = vmatpush1.msra.mxu0 %v246
    %279 = vmatprep.subr.mxu0 0.0
    %280 = vmatpush1.msra.mxu0 %v247
    %281 = vmatprep.subr.mxu0 0.0
    %282 = vmatpush1.msra.mxu0 %v248
    %283 = vmatprep.subr.mxu0 0.0
    %284 = vmatpush1.msra.mxu0 %v249
    %285 = vmatprep.subr.mxu0 0.0
    %286 = vmatpush1.msra.mxu0 %v250
    %287 = vmatprep.subr.mxu0 0.0
    %288 = vmatpush1.msra.mxu0 %v251
    %289 = vmatprep.subr.mxu0 0.0
    %290 = vmatpush1.msra.mxu0 %v252
    %291 = vmatprep.subr.mxu0 0.0
    %292 = vmatpush1.msra.mxu0 0.0
    %293 = vmatprep.subr.mxu0 0.0
    %294 = vmatpush1.msra.mxu0 0.0
    %295 = vmatprep.subr.mxu0 0.0
    %296 = vmatpush1.msra.mxu0 0.0
    %297 = vmatprep.subr.mxu0 0.0
    %298 = vmatpush1.msra.mxu0 0.0
    %299 = vmatprep.subr.mxu0 0.0
    %300 = vmatpush1.msra.mxu0 0.0
    %301 = vmatprep.subr.mxu0 0.0
    %302 = vmatpush1.msra.mxu0 0.0
    %303 = vmatprep.subr.mxu0 0.0
    %304 = vmatpush1.msra.mxu0 0.0
    %305 = vmatprep.subr.mxu0 0.0
    %306 = vmatpush1.msra.mxu0 0.0
    %307 = vmatprep.subr.mxu0 0.0
    %308 = vmatpush1.msra.mxu0 0.0
    %309 = vmatprep.subr.mxu0 0.0
    %310 = vmatpush1.msra.mxu0 0.0
    %311 = vmatprep.subr.mxu0 0.0
    %312 = vmatpush1.msra.mxu0 0.0
    %313 = vmatprep.subr.mxu0 0.0
    %314 = vmatpush1.msra.mxu0 0.0
    %315 = vmatprep.subr.mxu0 0.0
    %316 = vmatpush1.msra.mxu0 0.0
    %317 = vmatprep.subr.mxu0 0.0
    %318 = vmatpush1.msra.mxu0 0.0
    %319 = vmatprep.subr.mxu0 0.0
    %320 = vmatpush1.msra.mxu0 0.0
    %321 = vmatprep.subr.mxu0 0.0
    %322 = vmatpush1.msra.mxu0 0.0
    %323 = vmatprep.mubr.f32.mxu0 0.0
    %324 = vmatmul.mubr.f32.gmra.mrb[0].mxu0 %v235
    %v325 = vpop.f32.mrb[0].mxu0
    %v326 = vadd.f32 %v257, %v325
    %v327 = vpop.f32.mrb[0].mxu0
    %328 = vmatprep.mubr.f32.mxu0 0.0
    %329 = vmatmul.mubr.f32.gmra.mrb[0].mxu0 %v236
    %v330 = vpop.f32.mrb[0].mxu0
    %v331 = vadd.f32 %v257, %v330
    %v332 = vpop.f32.mrb[0].mxu0
    %333 = vdwg.mxu0
    %v334 = vmax.f32 %v326, 0.0
    %v335 = vmax.f32 %v331, 0.0
    %v336 = vld [vmem:[#allocation8] sm:$0xff]
    %v337 = vld [vmem:[#allocation8 + $0x8] sm:$0xff]
    %v338 = vld [vmem:[#allocation8 + $0x10] sm:$0xff]
    %v339 = vld [vmem:[#allocation8 + $0x18] sm:$0xff]
    %v340 = vld [vmem:[#allocation8 + $0x20] sm:$0xff]
    %v341 = vld [vmem:[#allocation8 + $0x28] sm:$0xff]
    %v342 = vld [vmem:[#allocation8 + $0x30] sm:$0xff]
    %v343 = vld [vmem:[#allocation8 + $0x38] sm:$0xff]
    %v344 = vld [vmem:[#allocation8 + $0x40] sm:$0xff]
    %v345 = vld [vmem:[#allocation8 + $0x48] sm:$0xff]
    %v346 = vld [vmem:[#allocation8 + $0x50] sm:$0xff]
    %v347 = vld [vmem:[#allocation8 + $0x58] sm:$0xff]
    %v348 = vld [vmem:[#allocation8 + $0x60] sm:$0xff]
    %v349 = vld [vmem:[#allocation8 + $0x68] sm:$0xff]
    %v350 = vld [vmem:[#allocation8 + $0x70] sm:$0xff]
    %v351 = vld [vmem:[#allocation8 + $0x78] sm:$0xff]
    %v353 = vlaneseq
    %v354 = vshrl.u32 %v353, 7
    %v355 = vsub.s32 0, %v354
    %v356 = vrot.slane %v92, %v355
    %358 = vmatprep.subr.mxu0 0.0
    %359 = vmatpush1.msra.mxu0 %v336
    %360 = vmatprep.subr.mxu0 0.0
    %361 = vmatpush1.msra.mxu0 %v337
    %362 = vmatprep.subr.mxu0 0.0
    %363 = vmatpush1.msra.mxu0 %v338
    %364 = vmatprep.subr.mxu0 0.0
    %365 = vmatpush1.msra.mxu0 %v339
    %366 = vmatprep.subr.mxu0 0.0
    %367 = vmatpush1.msra.mxu0 %v340
    %368 = vmatprep.subr.mxu0 0.0
    %369 = vmatpush1.msra.mxu0 %v341
    %370 = vmatprep.subr.mxu0 0.0
    %371 = vmatpush1.msra.mxu0 %v342
    %372 = vmatprep.subr.mxu0 0.0
    %373 = vmatpush1.msra.mxu0 %v343
    %374 = vmatprep.subr.mxu0 0.0
    %375 = vmatpush1.msra.mxu0 %v344
    %376 = vmatprep.subr.mxu0 0.0
    %377 = vmatpush1.msra.mxu0 %v345
    %378 = vmatprep.subr.mxu0 0.0
    %379 = vmatpush1.msra.mxu0 %v346
    %380 = vmatprep.subr.mxu0 0.0
    %381 = vmatpush1.msra.mxu0 %v347
    %382 = vmatprep.subr.mxu0 0.0
    %383 = vmatpush1.msra.mxu0 %v348
    %384 = vmatprep.subr.mxu0 0.0
    %385 = vmatpush1.msra.mxu0 %v349
    %386 = vmatprep.subr.mxu0 0.0
    %387 = vmatpush1.msra.mxu0 %v350
    %388 = vmatprep.subr.mxu0 0.0
    %389 = vmatpush1.msra.mxu0 %v351
    %390 = vmatprep.subr.mxu0 0.0
    %391 = vmatpush1.msra.mxu0 0.0
    %392 = vmatprep.subr.mxu0 0.0
    %393 = vmatpush1.msra.mxu0 0.0
    %394 = vmatprep.subr.mxu0 0.0
    %395 = vmatpush1.msra.mxu0 0.0
    %396 = vmatprep.subr.mxu0 0.0
    %397 = vmatpush1.msra.mxu0 0.0
    %398 = vmatprep.subr.mxu0 0.0
    %399 = vmatpush1.msra.mxu0 0.0
    %400 = vmatprep.subr.mxu0 0.0
    %401 = vmatpush1.msra.mxu0 0.0
    %402 = vmatprep.subr.mxu0 0.0
    %403 = vmatpush1.msra.mxu0 0.0
    %404 = vmatprep.subr.mxu0 0.0
    %405 = vmatpush1.msra.mxu0 0.0
    %406 = vmatprep.subr.mxu0 0.0
    %407 = vmatpush1.msra.mxu0 0.0
    %408 = vmatprep.subr.mxu0 0.0
    %409 = vmatpush1.msra.mxu0 0.0
    %410 = vmatprep.subr.mxu0 0.0
    %411 = vmatpush1.msra.mxu0 0.0
    %412 = vmatprep.subr.mxu0 0.0
    %413 = vmatpush1.msra.mxu0 0.0
    %414 = vmatprep.subr.mxu0 0.0
    %415 = vmatpush1.msra.mxu0 0.0
    %416 = vmatprep.subr.mxu0 0.0
    %417 = vmatpush1.msra.mxu0 0.0
    %418 = vmatprep.subr.mxu0 0.0
    %419 = vmatpush1.msra.mxu0 0.0
    %420 = vmatprep.subr.mxu0 0.0
    %421 = vmatpush1.msra.mxu0 0.0
    %422 = vmatprep.mubr.f32.mxu0 0.0
    %423 = vmatmul.mubr.f32.gmra.mrb[0].mxu0 %v334
    %v424 = vpop.f32.mrb[0].mxu0
    %v425 = vadd.f32 %v356, %v424
    %v426 = vpop.f32.mrb[0].mxu0
    %427 = vmatprep.mubr.f32.mxu0 0.0
    %428 = vmatmul.mubr.f32.gmra.mrb[0].mxu0 %v335
    %v429 = vpop.f32.mrb[0].mxu0
    %v430 = vadd.f32 %v356, %v429
    %v431 = vpop.f32.mrb[0].mxu0
    %432 = vdwg.mxu0
    %433 = vst [vmem:[#allocation10] sm:$0xff] %v425
    %434 = vst [vmem:[#allocation10 + $0x8] sm:$0xff] %v430
    // Predicated region
    $region54: #{tpu_custom_call.1} parent=1 // pred_check
      _
    $region55: #{tpu_custom_call.1} parent=1 // pred_check_branch
      %436 = sbr.rel (0) target = $region57
    $region56: #{tpu_custom_call.1} parent=1 // pred_region
      %s438 = ssub.s32 256, 256
      %439 = vsyncadd [#allocation4], %s438
      %s440 = sshll.u32 [#allocation10], 4
      %s441 = int_to_ptr.vmem [resolvable:$true] %s440
      %446 = dma.vmem_to_hbm [thread:$0]  %s441, 256, %s9, [#allocation4], 128, 128, 8
    $region57: #{tpu_custom_call.1} parent=1 // pred_fallthru
      _
    // Predicated region
    $region58: #{tpu_custom_call.1} parent=1 // pred_check
      _
    $region59: #{tpu_custom_call.1} parent=1 // pred_check_branch
      %448 = sbr.rel (0) target = $region61
    $region60: #{tpu_custom_call.1} parent=1 // pred_region
      %449 = dma.done [#allocation4], 256
    $region61: #{tpu_custom_call.1} parent=1 // pred_fallthru
      _
    %450 = vsyncpa [#allocation3], 1
    %451 = vsyncpa [#allocation6], 1
    %452 = vsyncpa [#allocation9], 1
    %453 = vsyncpa [#allocation4], 1

</llo_original>
